<compile_context>
chip_gen: v7x
topology: tpu7x:2x2x1
jax: 0.10.0
libtpu: 0.0.40
codegen_flags: <defaults>
</compile_context>

<pallas_src>
import jax
import jax.numpy as jnp
from jax.experimental import pallas as pl
from jax.experimental.pallas import tpu as pltpu


_LN_EPS = 1e-5  # PyTorch nn.LayerNorm default


def _round_up(x, m):
    return (x + m - 1) // m * m


def _default_compute_dtype():
    """bf16 MXU path on v6e/v7x; keep f32 on v5e and older."""
    try:
        kind = jax.devices()[0].device_kind.lower()
    except Exception:
        return jnp.float32
    if ("v6" in kind) or ("v7" in kind):
        return jnp.bfloat16
    return jnp.float32


# ---------------------------------------------------------------------------
# Kernels
# ---------------------------------------------------------------------------

def _layer_norm(x, gamma, beta):
    mu = jnp.mean(x, axis=-1, keepdims=True)
    var = jnp.mean(jnp.square(x - mu), axis=-1, keepdims=True)
    return (x - mu) * jax.lax.rsqrt(var + _LN_EPS) * gamma + beta


def _input_proj_kernel(x_ref, w1_ref, b1_ref, g1_ref, be1_ref,
                       w2_ref, b2_ref, g2_ref, be2_ref, out_ref):
    """Fused: ReLU(LN(x@Wp1+bp1)) -> ReLU(LN(h@Wp2+bp2)); dropout == identity (eval)."""
    h = jnp.dot(x_ref[...], w1_ref[...],
                preferred_element_type=jnp.float32) + b1_ref[...]
    h = _layer_norm(h, g1_ref[...], be1_ref[...])
    h = jnp.maximum(h, 0.0)  # activation (assumed ReLU; injected in PyTorch)
    h = jnp.dot(h.astype(w2_ref.dtype), w2_ref[...],
                preferred_element_type=jnp.float32) + b2_ref[...]
    h = _layer_norm(h, g2_ref[...], be2_ref[...])
    h = jnp.maximum(h, 0.0)
    out_ref[...] = h.astype(out_ref.dtype)


def _fc_decoder_kernel(hs_ref, w1_ref, b1_ref, w2_ref, b2_ref, out_ref):
    """Fused permute(1,0,2)+flatten + Linear + Sigmoid + Linear.

    hs_ref: (input_num, TB, D)   w1_ref: (input_num, D, H)
    flatten(permute(hs)) @ W1 == sum_s hs[s] @ W1[s]   (W1 reshaped from (input_num*D, H))
    """
    input_num = hs_ref.shape[0]
    tb = hs_ref.shape[1]
    hidden = w1_ref.shape[2]

    acc = jnp.zeros((tb, hidden), jnp.float32)
    for s in range(input_num):  # static unroll; input_num is small (e.g. 3)
        acc = acc + jnp.dot(hs_ref[s], w1_ref[s],
                            preferred_element_type=jnp.float32)
    h = jax.nn.sigmoid(acc + b1_ref[...])  # f32 EUP; dropout == identity (eval)
    o = jnp.dot(h.astype(w2_ref.dtype), w2_ref[...],
                preferred_element_type=jnp.float32) + b2_ref[...]
    out_ref[...] = o.astype(out_ref.dtype)


# ---------------------------------------------------------------------------
# Wrappers
# ---------------------------------------------------------------------------

def input_proj_forward(x, wp1, bp1, g1, be1, wp2, bp2, g2, be2,
                       *, tb=None, compute_dtype=None):
    """x: (batch, feature_len) -> (batch, dim_feedforward) float32."""
    compute_dtype = compute_dtype or _default_compute_dtype()
    batch, f_in = x.shape
    d2 = wp1.shape[1]
    d = wp2.shape[1]

    sub = 16 if compute_dtype == jnp.bfloat16 else 8
    if tb is None:
        tb = min(512, _round_up(batch, sub))
    tb = _round_up(tb, sub)
    batch_pad = _round_up(batch, tb)

    x = x.astype(compute_dtype)
    if batch_pad != batch:
        x = jnp.pad(x, ((0, batch_pad - batch), (0, 0)))
    wp1 = wp1.astype(compute_dtype)
    wp2 = wp2.astype(compute_dtype)
    b1_2d = bp1.reshape(1, d2).astype(jnp.float32)
    g1_2d = g1.reshape(1, d2).astype(jnp.float32)
    be1_2d = be1.reshape(1, d2).astype(jnp.float32)
    b2_2d = bp2.reshape(1, d).astype(jnp.float32)
    g2_2d = g2.reshape(1, d).astype(jnp.float32)
    be2_2d = be2.reshape(1, d).astype(jnp.float32)

    grid = (batch_pad // tb,)
    itemsize = jnp.dtype(compute_dtype).itemsize
    cost = pl.CostEstimate(
        flops=2 * batch_pad * (f_in * d2 + d2 * d) + 12 * batch_pad * (d2 + d),
        transcendentals=2 * batch_pad,
        bytes_accessed=(batch_pad * f_in + f_in * d2 + d2 * d) * itemsize
        + (4 * d2 + 4 * d) * 4 + batch_pad * d * 4,
    )

    out = pl.pallas_call(
        _input_proj_kernel,
        out_shape=jax.ShapeDtypeStruct((batch_pad, d), jnp.float32),
        grid=grid,
        in_specs=[
            pl.BlockSpec((tb, f_in), lambda b: (b, 0)),
            pl.BlockSpec((f_in, d2), lambda b: (0, 0)),
            pl.BlockSpec((1, d2), lambda b: (0, 0)),
            pl.BlockSpec((1, d2), lambda b: (0, 0)),
            pl.BlockSpec((1, d2), lambda b: (0, 0)),
            pl.BlockSpec((d2, d), lambda b: (0, 0)),
            pl.BlockSpec((1, d), lambda b: (0, 0)),
            pl.BlockSpec((1, d), lambda b: (0, 0)),
            pl.BlockSpec((1, d), lambda b: (0, 0)),
        ],
        out_specs=pl.BlockSpec((tb, d), lambda b: (b, 0)),
        compiler_params=pltpu.CompilerParams(
            dimension_semantics=("parallel",),
            vmem_limit_bytes=32 * 1024 * 1024,
        ),
        cost_estimate=cost,
    )(x, wp1, b1_2d, g1_2d, be1_2d, wp2, b2_2d, g2_2d, be2_2d)
    return out[:batch] if batch_pad != batch else out


def fc_decoder_forward(hs, w1, b1, w2, b2, *, tb=None, compute_dtype=None):
    """hs: (input_num, batch, D) -> (batch, num_class) float32.

    w1: (D*input_num, D//input_num) stored (in, out);  b1: (D//input_num,)
    w2: (D//input_num, num_class)   stored (in, out);  b2: (num_class,)
    """
    compute_dtype = compute_dtype or _default_compute_dtype()
    input_num, batch, d = hs.shape
    hidden = w1.shape[1]
    num_class = w2.shape[1]
    n_pad = _round_up(num_class, 128)  # lane-dense output block

    sub = 16 if compute_dtype == jnp.bfloat16 else 8
    if tb is None:
        tb = min(512, _round_up(batch, sub))
    tb = _round_up(tb, sub)
    batch_pad = _round_up(batch, tb)

    hs_c = hs.astype(compute_dtype)
    if batch_pad != batch:
        hs_c = jnp.pad(hs_c, ((0, 0), (0, batch_pad - batch), (0, 0)))

    # (input_num*D, H) -> (input_num, D, H): the permute/flatten is fused into the
    # kernel, which consumes hs in its native (S, B, D) layout.
    w1_r = w1.reshape(input_num, d, hidden).astype(compute_dtype)
    w2_p = jnp.zeros((hidden, n_pad), compute_dtype).at[:, :num_class].set(
        w2.astype(compute_dtype))
    b1_2d = b1.reshape(1, hidden).astype(jnp.float32)
    b2_2d = jnp.zeros((1, n_pad), jnp.float32).at[0, :num_class].set(
        b2.astype(jnp.float32))

    grid = (batch_pad // tb,)
    itemsize = jnp.dtype(compute_dtype).itemsize
    cost = pl.CostEstimate(
        flops=2 * batch_pad * (input_num * d * hidden + hidden * n_pad),
        transcendentals=batch_pad * hidden,
        bytes_accessed=(batch_pad * input_num * d + input_num * d * hidden
                        + hidden * n_pad) * itemsize
        + (hidden + n_pad) * 4 + batch_pad * n_pad * 4,
    )

    out = pl.pallas_call(
        _fc_decoder_kernel,
        out_shape=jax.ShapeDtypeStruct((batch_pad, n_pad), jnp.float32),
        grid=grid,
        in_specs=[
            pl.BlockSpec((input_num, tb, d), lambda b: (0, b, 0)),
            pl.BlockSpec((input_num, d, hidden), lambda b: (0, 0, 0)),
            pl.BlockSpec((1, hidden), lambda b: (0, 0)),
            pl.BlockSpec((hidden, n_pad), lambda b: (0, 0)),
            pl.BlockSpec((1, n_pad), lambda b: (0, 0)),
        ],
        out_specs=pl.BlockSpec((tb, n_pad), lambda b: (b, 0)),
        compiler_params=pltpu.CompilerParams(
            dimension_semantics=("parallel",),
            vmem_limit_bytes=32 * 1024 * 1024,
        ),
        cost_estimate=cost,
    )(hs_c, w1_r, b1_2d, w2_p, b2_2d)
    return out[:batch, :num_class]


def pre_train_model_forward(src_x, params, transformer_encoder_fn,
                            *, tb=None, compute_dtype=None):
    """Pre_Train_Model.forward: returns (predict_out, hs).

    src_x: (batch, feature_len)  == src[0]
    transformer_encoder_fn: callable (1, batch, D) -> (input_num, batch, D)
    """
    in_x = input_proj_forward(
        src_x, params["wp1"], params["bp1"], params["g1"], params["be1"],
        params["wp2"], params["bp2"], params["g2"], params["be2"],
        tb=tb, compute_dtype=compute_dtype)
    in_x = in_x[None]  # unsqueeze(0) -> (1, B, D)
    # TODO(synk): transformerEncoder is an externally-injected nn.Module whose
    # architecture is not defined in this file; it is taken as a callable here.
    hs = transformer_encoder_fn(in_x)
    predict_out = fc_decoder_forward(
        hs, params["w1"], params["b1"], params["w2"], params["b2"],
        tb=tb, compute_dtype=compute_dtype)
    return predict_out, hs


# ---------------------------------------------------------------------------
# Parameter init (PyTorch Linear-style uniform bounds; LN gamma=1, beta=0)
# ---------------------------------------------------------------------------

def init_params(key, feature_len, dim_feedforward, num_class, input_num):
    d = dim_feedforward
    hidden = d // input_num
    ks = jax.random.split(key, 8)

    def linear(kw, kb, fan_in, fan_out):
        bound = 1.0 / float(fan_in) ** 0.5
        w = jax.random.uniform(kw, (fan_in, fan_out), jnp.float32, -bound, bound)
        b = jax.random.uniform(kb, (fan_out,), jnp.float32, -bound, bound)
        return w, b

    wp1, bp1 = linear(ks[0], ks[1], feature_len, 2 * d)
    wp2, bp2 = linear(ks[2], ks[3], 2 * d, d)
    w1, b1 = linear(ks[4], ks[5], d * input_num, hidden)
    w2, b2 = linear(ks[6], ks[7], hidden, num_class)
    return dict(
        wp1=wp1, bp1=bp1,
        g1=jnp.ones((2 * d,), jnp.float32), be1=jnp.zeros((2 * d,), jnp.float32),
        wp2=wp2, bp2=bp2,
        g2=jnp.ones((d,), jnp.float32), be2=jnp.zeros((d,), jnp.float32),
        w1=w1, b1=b1, w2=w2, b2=b2,
    )


# ---------------------------------------------------------------------------
# Pure-JAX reference (mirrors the same compute-dtype casts, f32 accumulation)
# ---------------------------------------------------------------------------

def _reference_forward(src_x, params, transformer_encoder_fn, compute_dtype):
    cd = compute_dtype

    def ln(x, g, b):
        mu = jnp.mean(x, axis=-1, keepdims=True)
        var = jnp.mean(jnp.square(x - mu), axis=-1, keepdims=True)
        return (x - mu) * jax.lax.rsqrt(var + _LN_EPS) * g + b

    h = jnp.dot(src_x.astype(cd), params["wp1"].astype(cd),
                preferred_element_type=jnp.float32) + params["bp1"]
    h = jnp.maximum(ln(h, params["g1"], params["be1"]), 0.0)
    h = jnp.dot(h.astype(cd), params["wp2"].astype(cd),
                preferred_element_type=jnp.float32) + params["bp2"]
    h = jnp.maximum(ln(h, params["g2"], params["be2"]), 0.0)

    hs = transformer_encoder_fn(h[None])
    input_num, batch, d = hs.shape
    xf = jnp.transpose(hs, (1, 0, 2)).reshape(batch, input_num * d).astype(cd)
    z = jax.nn.sigmoid(
        jnp.dot(xf, params["w1"].astype(cd),
                preferred_element_type=jnp.float32) + params["b1"])
    out = jnp.dot(z.astype(cd), params["w2"].astype(cd),
                  preferred_element_type=jnp.float32) + params["b2"]
    return out, hs


if __name__ == "__main__":
    # Small shapes consistent with the module:
    #   input_num=3, dim_feedforward=96 (divisible by input_num -> hidden=32),
    #   num_class=16, feature_len=40, batch=32, batch tile tb=16 (grid of 2).
    input_num = 3
    dim_feedforward = 96
    num_class = 16
    feature_len = 40
    batch = 32
    tb = 16

    compute_dtype = _default_compute_dtype()

    key = jax.random.PRNGKey(0)
    k_x, k_p = jax.random.split(key)
    src_x = jax.random.normal(k_x, (batch, feature_len), jnp.float32)
    params = init_params(k_p, feature_len, dim_feedforward, num_class, input_num)

    # Demo stand-in for the externally-injected transformerEncoder: it only
    # wires shapes ((1, B, D) -> (input_num, B, D)).  The real encoder is
    # supplied by the caller of pre_train_model_forward.
    def demo_encoder(x):
        return jnp.tile(x, (input_num, 1, 1))

    predict_out, hs = pre_train_model_forward(
        src_x, params, demo_encoder, tb=tb, compute_dtype=compute_dtype)
    predict_out = jax.block_until_ready(predict_out)
    hs = jax.block_until_ready(hs)

    ref_out, ref_hs = _reference_forward(src_x, params, demo_encoder, compute_dtype)

    assert predict_out.shape == (batch, num_class)
    assert hs.shape == (input_num, batch, dim_feedforward)
    tol = 2e-2 if compute_dtype == jnp.bfloat16 else 1e-4
    assert jnp.allclose(hs, ref_hs, atol=tol, rtol=tol), "hs mismatch"
    assert jnp.allclose(predict_out, ref_out, atol=tol, rtol=tol), "predict_out mismatch"

    print("KERNEL_OK")
</pallas_src>

<mosaic_0001>
module attributes {stable_mosaic.version = 11 : i64} {
  func.func @_input_proj_kernel(%arg0: i32, %arg1: memref<16x40xf32, #tpu.memory_space<vmem>>, %arg2: memref<40x192xf32, #tpu.memory_space<vmem>>, %arg3: memref<1x192xf32, #tpu.memory_space<vmem>>, %arg4: memref<1x192xf32, #tpu.memory_space<vmem>>, %arg5: memref<1x192xf32, #tpu.memory_space<vmem>>, %arg6: memref<192x96xf32, #tpu.memory_space<vmem>>, %arg7: memref<1x96xf32, #tpu.memory_space<vmem>>, %arg8: memref<1x96xf32, #tpu.memory_space<vmem>>, %arg9: memref<1x96xf32, #tpu.memory_space<vmem>>, %arg10: memref<16x96xf32, #tpu.memory_space<vmem>>) attributes {dimension_semantics = [#tpu.dimension_semantics<parallel>], iteration_bounds = array<i64: 2>, scalar_prefetch = 0 : i64, scratch_operands = 0 : i64, tpu.core_type = #tpu.core_type<tc>, window_params = [{transform_indices = @transform_0, window_bounds = array<i64: 16, 40>}, {pipeline_mode = #tpu.pipeline_mode<synchronous>, transform_indices = @transform_1, window_bounds = array<i64: 40, 192>}, {pipeline_mode = #tpu.pipeline_mode<synchronous>, transform_indices = @transform_2, window_bounds = array<i64: 1, 192>}, {pipeline_mode = #tpu.pipeline_mode<synchronous>, transform_indices = @transform_3, window_bounds = array<i64: 1, 192>}, {pipeline_mode = #tpu.pipeline_mode<synchronous>, transform_indices = @transform_4, window_bounds = array<i64: 1, 192>}, {pipeline_mode = #tpu.pipeline_mode<synchronous>, transform_indices = @transform_5, window_bounds = array<i64: 192, 96>}, {pipeline_mode = #tpu.pipeline_mode<synchronous>, transform_indices = @transform_6, window_bounds = array<i64: 1, 96>}, {pipeline_mode = #tpu.pipeline_mode<synchronous>, transform_indices = @transform_7, window_bounds = array<i64: 1, 96>}, {pipeline_mode = #tpu.pipeline_mode<synchronous>, transform_indices = @transform_8, window_bounds = array<i64: 1, 96>}, {transform_indices = @transform_9, window_bounds = array<i64: 16, 96>}]} {
    %c0 = arith.constant 0 : index
    %c0_0 = arith.constant 0 : index
    %0 = vector.load %arg1[%c0, %c0_0] : memref<16x40xf32, #tpu.memory_space<vmem>>, vector<16x40xf32>
    %c0_1 = arith.constant 0 : index
    %c0_2 = arith.constant 0 : index
    %1 = vector.load %arg2[%c0_1, %c0_2] : memref<40x192xf32, #tpu.memory_space<vmem>>, vector<40x192xf32>
    %cst = arith.constant dense<0.000000e+00> : vector<16x192xf32>
    %2 = tpu.matmul %0, %1, %cst {dimension_numbers = #tpu.dot_dimension_numbers<[1], [0], [0], [1], [0, 0, 1, 1], [], []>} : vector<16x40xf32>, vector<40x192xf32>, vector<16x192xf32> -> vector<16x192xf32>
    %c0_3 = arith.constant 0 : index
    %c0_4 = arith.constant 0 : index
    %3 = vector.load %arg3[%c0_3, %c0_4] : memref<1x192xf32, #tpu.memory_space<vmem>>, vector<1x192xf32>
    %4 = vector.broadcast %3 : vector<1x192xf32> to vector<16x192xf32>
    %5 = arith.addf %2, %4 : vector<16x192xf32>
    %c0_5 = arith.constant 0 : index
    %c0_6 = arith.constant 0 : index
    %6 = vector.load %arg4[%c0_5, %c0_6] : memref<1x192xf32, #tpu.memory_space<vmem>>, vector<1x192xf32>
    %c0_7 = arith.constant 0 : index
    %c0_8 = arith.constant 0 : index
    %7 = vector.load %arg5[%c0_7, %c0_8] : memref<1x192xf32, #tpu.memory_space<vmem>>, vector<1x192xf32>
    %cst_9 = arith.constant dense<0.000000e+00> : vector<16xf32>
    %8 = vector.multi_reduction <add>, %5, %cst_9 [1] : vector<16x192xf32> to vector<16xf32>
    %9 = vector.shape_cast %8 : vector<16xf32> to vector<16x1xf32>
    %cst_10 = arith.constant 1.920000e+02 : f32
    %10 = vector.broadcast %cst_10 : f32 to vector<16x1xf32>
    %11 = arith.divf %9, %10 : vector<16x1xf32>
    %12 = vector.broadcast %11 : vector<16x1xf32> to vector<16x192xf32>
    %13 = arith.subf %5, %12 : vector<16x192xf32>
    %14 = arith.mulf %13, %13 : vector<16x192xf32>
    %cst_11 = arith.constant dense<0.000000e+00> : vector<16xf32>
    %15 = vector.multi_reduction <add>, %14, %cst_11 [1] : vector<16x192xf32> to vector<16xf32>
    %16 = vector.shape_cast %15 : vector<16xf32> to vector<16x1xf32>
    %cst_12 = arith.constant 1.920000e+02 : f32
    %17 = vector.broadcast %cst_12 : f32 to vector<16x1xf32>
    %18 = arith.divf %16, %17 : vector<16x1xf32>
    %19 = vector.broadcast %11 : vector<16x1xf32> to vector<16x192xf32>
    %20 = arith.subf %5, %19 : vector<16x192xf32>
    %cst_13 = arith.constant 9.99999974E-6 : f32
    %21 = vector.broadcast %cst_13 : f32 to vector<16x1xf32>
    %22 = arith.addf %18, %21 : vector<16x1xf32>
    %23 = math.rsqrt %22 : vector<16x1xf32>
    %24 = vector.broadcast %23 : vector<16x1xf32> to vector<16x192xf32>
    %25 = arith.mulf %20, %24 : vector<16x192xf32>
    %26 = vector.broadcast %6 : vector<1x192xf32> to vector<16x192xf32>
    %27 = arith.mulf %25, %26 : vector<16x192xf32>
    %28 = vector.broadcast %7 : vector<1x192xf32> to vector<16x192xf32>
    %29 = arith.addf %27, %28 : vector<16x192xf32>
    %cst_14 = arith.constant 0.000000e+00 : f32
    %30 = vector.broadcast %cst_14 : f32 to vector<16x192xf32>
    %31 = arith.maximumf %29, %30 : vector<16x192xf32>
    %c0_15 = arith.constant 0 : index
    %c0_16 = arith.constant 0 : index
    %32 = vector.load %arg6[%c0_15, %c0_16] : memref<192x96xf32, #tpu.memory_space<vmem>>, vector<192x96xf32>
    %cst_17 = arith.constant dense<0.000000e+00> : vector<16x96xf32>
    %33 = tpu.matmul %31, %32, %cst_17 {dimension_numbers = #tpu.dot_dimension_numbers<[1], [0], [0], [1], [0, 0, 1, 1], [], []>} : vector<16x192xf32>, vector<192x96xf32>, vector<16x96xf32> -> vector<16x96xf32>
    %c0_18 = arith.constant 0 : index
    %c0_19 = arith.constant 0 : index
    %34 = vector.load %arg7[%c0_18, %c0_19] : memref<1x96xf32, #tpu.memory_space<vmem>>, vector<1x96xf32>
    %35 = vector.broadcast %34 : vector<1x96xf32> to vector<16x96xf32>
    %36 = arith.addf %33, %35 : vector<16x96xf32>
    %c0_20 = arith.constant 0 : index
    %c0_21 = arith.constant 0 : index
    %37 = vector.load %arg8[%c0_20, %c0_21] : memref<1x96xf32, #tpu.memory_space<vmem>>, vector<1x96xf32>
    %c0_22 = arith.constant 0 : index
    %c0_23 = arith.constant 0 : index
    %38 = vector.load %arg9[%c0_22, %c0_23] : memref<1x96xf32, #tpu.memory_space<vmem>>, vector<1x96xf32>
    %cst_24 = arith.constant dense<0.000000e+00> : vector<16xf32>
    %39 = vector.multi_reduction <add>, %36, %cst_24 [1] : vector<16x96xf32> to vector<16xf32>
    %40 = vector.shape_cast %39 : vector<16xf32> to vector<16x1xf32>
    %cst_25 = arith.constant 9.600000e+01 : f32
    %41 = vector.broadcast %cst_25 : f32 to vector<16x1xf32>
    %42 = arith.divf %40, %41 : vector<16x1xf32>
    %43 = vector.broadcast %42 : vector<16x1xf32> to vector<16x96xf32>
    %44 = arith.subf %36, %43 : vector<16x96xf32>
    %45 = arith.mulf %44, %44 : vector<16x96xf32>
    %cst_26 = arith.constant dense<0.000000e+00> : vector<16xf32>
    %46 = vector.multi_reduction <add>, %45, %cst_26 [1] : vector<16x96xf32> to vector<16xf32>
    %47 = vector.shape_cast %46 : vector<16xf32> to vector<16x1xf32>
    %cst_27 = arith.constant 9.600000e+01 : f32
    %48 = vector.broadcast %cst_27 : f32 to vector<16x1xf32>
    %49 = arith.divf %47, %48 : vector<16x1xf32>
    %50 = vector.broadcast %42 : vector<16x1xf32> to vector<16x96xf32>
    %51 = arith.subf %36, %50 : vector<16x96xf32>
    %cst_28 = arith.constant 9.99999974E-6 : f32
    %52 = vector.broadcast %cst_28 : f32 to vector<16x1xf32>
    %53 = arith.addf %49, %52 : vector<16x1xf32>
    %54 = math.rsqrt %53 : vector<16x1xf32>
    %55 = vector.broadcast %54 : vector<16x1xf32> to vector<16x96xf32>
    %56 = arith.mulf %51, %55 : vector<16x96xf32>
    %57 = vector.broadcast %37 : vector<1x96xf32> to vector<16x96xf32>
    %58 = arith.mulf %56, %57 : vector<16x96xf32>
    %59 = vector.broadcast %38 : vector<1x96xf32> to vector<16x96xf32>
    %60 = arith.addf %58, %59 : vector<16x96xf32>
    %cst_29 = arith.constant 0.000000e+00 : f32
    %61 = vector.broadcast %cst_29 : f32 to vector<16x96xf32>
    %62 = arith.maximumf %60, %61 : vector<16x96xf32>
    %c0_30 = arith.constant 0 : index
    %c0_31 = arith.constant 0 : index
    %63 = vector.load %arg10[%c0_30, %c0_31] : memref<16x96xf32, #tpu.memory_space<vmem>>, vector<16x96xf32>
    tpu.vector_store %arg10[%c0_30, %c0_31], %62 {strides = array<i32>} : memref<16x96xf32, #tpu.memory_space<vmem>>, vector<16x96xf32>,
    return
  }
  func.func @transform_0(%arg0: i32) -> (i32, i32) {
    %c0_i32 = arith.constant 0 : i32
    %c0_i32_0 = arith.constant 0 : i32
    return %arg0, %c0_i32 : i32, i32
  }
  func.func @transform_1(%arg0: i32) -> (i32, i32) {
    %c0_i32 = arith.constant 0 : i32
    %c0_i32_0 = arith.constant 0 : i32
    %c0_i32_1 = arith.constant 0 : i32
    return %c0_i32, %c0_i32_0 : i32, i32
  }
  func.func @transform_2(%arg0: i32) -> (i32, i32) {
    %c0_i32 = arith.constant 0 : i32
    %c0_i32_0 = arith.constant 0 : i32
    %c0_i32_1 = arith.constant 0 : i32
    return %c0_i32, %c0_i32_0 : i32, i32
  }
  func.func @transform_3(%arg0: i32) -> (i32, i32) {
    %c0_i32 = arith.constant 0 : i32
    %c0_i32_0 = arith.constant 0 : i32
    %c0_i32_1 = arith.constant 0 : i32
    return %c0_i32, %c0_i32_0 : i32, i32
  }
  func.func @transform_4(%arg0: i32) -> (i32, i32) {
    %c0_i32 = arith.constant 0 : i32
    %c0_i32_0 = arith.constant 0 : i32
    %c0_i32_1 = arith.constant 0 : i32
    return %c0_i32, %c0_i32_0 : i32, i32
  }
  func.func @transform_5(%arg0: i32) -> (i32, i32) {
    %c0_i32 = arith.constant 0 : i32
    %c0_i32_0 = arith.constant 0 : i32
    %c0_i32_1 = arith.constant 0 : i32
    return %c0_i32, %c0_i32_0 : i32, i32
  }
  func.func @transform_6(%arg0: i32) -> (i32, i32) {
    %c0_i32 = arith.constant 0 : i32
    %c0_i32_0 = arith.constant 0 : i32
    %c0_i32_1 = arith.constant 0 : i32
    return %c0_i32, %c0_i32_0 : i32, i32
  }
  func.func @transform_7(%arg0: i32) -> (i32, i32) {
    %c0_i32 = arith.constant 0 : i32
    %c0_i32_0 = arith.constant 0 : i32
    %c0_i32_1 = arith.constant 0 : i32
    return %c0_i32, %c0_i32_0 : i32, i32
  }
  func.func @transform_8(%arg0: i32) -> (i32, i32) {
    %c0_i32 = arith.constant 0 : i32
    %c0_i32_0 = arith.constant 0 : i32
    %c0_i32_1 = arith.constant 0 : i32
    return %c0_i32, %c0_i32_0 : i32, i32
  }
  func.func @transform_9(%arg0: i32) -> (i32, i32) {
    %c0_i32 = arith.constant 0 : i32
    %c0_i32_0 = arith.constant 0 : i32
    return %arg0, %c0_i32 : i32, i32
  }
}

</mosaic_0001>

<llo_original>
// kernel: tpu_custom_call.1
$region0: #{tpu_custom_call.1}
  #allocation0 [shape = 'u32[]', space=smem, size = 0x4, offset = 0x4, fixed_abs, tag = 'smem constant byte address 0x4 - core index']
  #allocation1 [shape = 'u32[144,128]{1,0:T(1,128)}', space=vmem, size = 0x12000, scoped, tag = 'internal scratch']
  %s0 = inlined_call_operand.hbm [shape: f32[32,40], index: 0, kind: input, shape index: {}]
  %s1 = inlined_call_operand.hbm [shape: f32[40,192], index: 1, kind: input, shape index: {}]
  %s2 = inlined_call_operand.vmem [shape: f32[1,192], index: 2, kind: input, shape index: {}]
  %s3 = inlined_call_operand.vmem [shape: f32[1,192], index: 3, kind: input, shape index: {}]
  %s4 = inlined_call_operand.vmem [shape: f32[1,192], index: 4, kind: input, shape index: {}]
  %s5 = inlined_call_operand.hbm [shape: f32[192,96], index: 5, kind: input, shape index: {}]
  %s6 = inlined_call_operand.vmem [shape: f32[1,96], index: 6, kind: input, shape index: {}]
  %s7 = inlined_call_operand.vmem [shape: f32[1,96], index: 7, kind: input, shape index: {}]
  %s8 = inlined_call_operand.vmem [shape: f32[1,96], index: 8, kind: input, shape index: {}]
  %s9 = inlined_call_operand.hbm [shape: f32[32,96], index: 9, kind: output, shape index: {}]
  %s10 = sld [smem:[#allocation0]]
  $region81: #{tpu_custom_call.1} parent=0
    _
  %s12 = ssub.s32 1, %s10
  %s13 = scalar_select 0, %s12, %s10
  $region1: #{tpu_custom_call.1} parent=0
    #allocation2 [shape = 'u8[16384]{0}', space=vmem, size = 0x4000, scoped, tag = 'input window, operand 0']
    #allocation3 [shape = 's32[2]{0}', space=sflag, size = 0x8, scoped, tag = 'scoped memory for tpu_custom_call.1']
    #allocation4 [shape = 's32[2]{0}', space=sflag, size = 0x8, scoped, tag = 'scoped memory for tpu_custom_call.1']
    #allocation5 [shape = 'u8[40960]{0}', space=vmem, size = 0xa000, scoped, tag = 'input window, operand 1, single buffered']
    #allocation6 [shape = 's32[1]{0}', space=sflag, size = 0x4, scoped, tag = 'scoped memory for tpu_custom_call.1']
    #allocation7 [shape = 'u8[98304]{0}', space=vmem, size = 0x18000, scoped, tag = 'input window, operand 5, single buffered']
    #allocation8 [shape = 'u8[16384]{0}', space=vmem, size = 0x4000, scoped, tag = 'output window, operand 0']
    %14 = vsyncpa [#allocation3], 0
    %s15 = scalar_lea.sflag [#allocation3], 1
    %16 = vsyncpa %s15, 0
    %17 = vsyncpa [#allocation6], 0
    %18 = vsyncpa [#allocation4], 0
    %s19 = scalar_lea.sflag [#allocation4], 1
    %20 = vsyncpa %s19, 0
    loop: start=0, step=1, limit=4
    $region2: #{tpu_custom_call.1} parent=1 // loop_pre_header
      _
    $region3: #{tpu_custom_call.1} parent=1 // loop_header
      %s22 = sphi 0, %s26
      %p23 = scmp.ge.s32.totalorder %s22, 4
      %s32 = sphi 0, %s34
      %s35 = sphi 0, %s32
      %s36 = sphi 0, %s35
      %s52 = sphi 0, %s36
      %s56 = sphi 0, %s56
      %s58 = sphi 0, %s56
      %s59 = sphi 0, %s58
      %s73 = sphi 0, %s59
      %s77 = sphi 0, %s77
      %s79 = sphi 0, %s77
      %s80 = sphi 0, %s79
      %s94 = sphi 0, %s80
      %s98 = sphi 0, %s98
      %s100 = sphi 0, %s98
      %s101 = sphi 0, %s100
      %s115 = sphi 0, %s101
      %s119 = sphi 0, %s119
      %s121 = sphi 0, %s119
      %s122 = sphi 0, %s121
      %s136 = sphi 0, %s122
      %s140 = sphi 0, %s140
      %s142 = sphi 0, %s140
      %s143 = sphi 0, %s142
      %s157 = sphi 0, %s143
      %s161 = sphi 0, %s161
      %s163 = sphi 0, %s161
      %s164 = sphi 0, %s163
      %s178 = sphi 0, %s164
      %s182 = sphi 0, %s182
      %s184 = sphi 0, %s182
      %s185 = sphi 0, %s184
      %s199 = sphi 0, %s185
      %s203 = sphi 0, %s203
      %s205 = sphi 0, %s203
      %s206 = sphi 0, %s205
      %s220 = sphi 0, %s206
      %s226 = sphi 0, %s228
      %s229 = sphi 0, %s226
      %s230 = sphi 0, %s229
      %s246 = sphi 0, %s230
    $region4: #{tpu_custom_call.1} parent=1 // loop_header_branch
      %25 = sbr.rel (%p23) target = $region8
    $region5: #{tpu_custom_call.1} parent=1 // loop_body
      %s27 = ssub.s32 %s22, 1
      %s28 = ssub.s32 %s22, 2
      %s29 = sadd.s32 %s22, 1
      %s30 = ssub.s32 %s22, %s29
      %p31 = scmp.eq.s32.totalorder %s30, 0
      %s33 = sadd.s32 %s32, 1
      %s34 = scalar_select %p31, %s32, %s33
      %p37 = pneg %p31
      %p38 = scmp.eq.s32.totalorder %s22, 1
      %p39 = por %p37, %p38
      %p40 = scmp.ne.s32.totalorder %s32, %s35
      %p41 = scmp.eq.s32.totalorder %s22, 0
      %p42 = por %p40, %p41
      %p43 = scmp.ne.s32.totalorder %s32, %s35
      %p44 = scmp.eq.s32.totalorder %s27, 1
      %p45 = por %p43, %p44
      %p46 = scmp.ne.s32.totalorder %s35, %s36
      %p47 = scmp.eq.s32.totalorder %s27, 0
      %p48 = por %p46, %p47
      %p49 = scmp.ne.s32.totalorder %s35, %s36
      %p50 = scmp.eq.s32.totalorder %s28, 1
      %p51 = por %p49, %p50
      %p53 = scmp.ne.s32.totalorder %s36, %s52
      %p54 = scmp.eq.s32.totalorder %s28, 0
      %p55 = por %p53, %p54
      %s57 = sadd.s32 %s56, 1
      %p60 = scmp.eq.s32.totalorder %s22, 1
      %p61 = scmp.ne.s32.totalorder %s56, %s58
      %p62 = scmp.eq.s32.totalorder %s22, 0
      %p63 = por %p61, %p62
      %p64 = scmp.ne.s32.totalorder %s56, %s58
      %p65 = scmp.eq.s32.totalorder %s27, 1
      %p66 = por %p64, %p65
      %p67 = scmp.ne.s32.totalorder %s58, %s59
      %p68 = scmp.eq.s32.totalorder %s27, 0
      %p69 = por %p67, %p68
      %p70 = scmp.ne.s32.totalorder %s58, %s59
      %p71 = scmp.eq.s32.totalorder %s28, 1
      %p72 = por %p70, %p71
      %p74 = scmp.ne.s32.totalorder %s59, %s73
      %p75 = scmp.eq.s32.totalorder %s28, 0
      %p76 = por %p74, %p75
      %s78 = sadd.s32 %s77, 1
      %p81 = scmp.eq.s32.totalorder %s22, 1
      %p82 = scmp.ne.s32.totalorder %s77, %s79
      %p83 = scmp.eq.s32.totalorder %s22, 0
      %p84 = por %p82, %p83
      %p85 = scmp.ne.s32.totalorder %s77, %s79
      %p86 = scmp.eq.s32.totalorder %s27, 1
      %p87 = por %p85, %p86
      %p88 = scmp.ne.s32.totalorder %s79, %s80
      %p89 = scmp.eq.s32.totalorder %s27, 0
      %p90 = por %p88, %p89
      %p91 = scmp.ne.s32.totalorder %s79, %s80
      %p92 = scmp.eq.s32.totalorder %s28, 1
      %p93 = por %p91, %p92
      %p95 = scmp.ne.s32.totalorder %s80, %s94
      %p96 = scmp.eq.s32.totalorder %s28, 0
      %p97 = por %p95, %p96
      %s99 = sadd.s32 %s98, 1
      %p102 = scmp.eq.s32.totalorder %s22, 1
      %p103 = scmp.ne.s32.totalorder %s98, %s100
      %p104 = scmp.eq.s32.totalorder %s22, 0
      %p105 = por %p103, %p104
      %p106 = scmp.ne.s32.totalorder %s98, %s100
      %p107 = scmp.eq.s32.totalorder %s27, 1
      %p108 = por %p106, %p107
      %p109 = scmp.ne.s32.totalorder %s100, %s101
      %p110 = scmp.eq.s32.totalorder %s27, 0
      %p111 = por %p109, %p110
      %p112 = scmp.ne.s32.totalorder %s100, %s101
      %p113 = scmp.eq.s32.totalorder %s28, 1
      %p114 = por %p112, %p113
      %p116 = scmp.ne.s32.totalorder %s101, %s115
      %p117 = scmp.eq.s32.totalorder %s28, 0
      %p118 = por %p116, %p117
      %s120 = sadd.s32 %s119, 1
      %p123 = scmp.eq.s32.totalorder %s22, 1
      %p124 = scmp.ne.s32.totalorder %s119, %s121
      %p125 = scmp.eq.s32.totalorder %s22, 0
      %p126 = por %p124, %p125
      %p127 = scmp.ne.s32.totalorder %s119, %s121
      %p128 = scmp.eq.s32.totalorder %s27, 1
      %p129 = por %p127, %p128
      %p130 = scmp.ne.s32.totalorder %s121, %s122
      %p131 = scmp.eq.s32.totalorder %s27, 0
      %p132 = por %p130, %p131
      %p133 = scmp.ne.s32.totalorder %s121, %s122
      %p134 = scmp.eq.s32.totalorder %s28, 1
      %p135 = por %p133, %p134
      %p137 = scmp.ne.s32.totalorder %s122, %s136
      %p138 = scmp.eq.s32.totalorder %s28, 0
      %p139 = por %p137, %p138
      %s141 = sadd.s32 %s140, 1
      %p144 = scmp.eq.s32.totalorder %s22, 1
      %p145 = scmp.ne.s32.totalorder %s140, %s142
      %p146 = scmp.eq.s32.totalorder %s22, 0
      %p147 = por %p145, %p146
      %p148 = scmp.ne.s32.totalorder %s140, %s142
      %p149 = scmp.eq.s32.totalorder %s27, 1
      %p150 = por %p148, %p149
      %p151 = scmp.ne.s32.totalorder %s142, %s143
      %p152 = scmp.eq.s32.totalorder %s27, 0
      %p153 = por %p151, %p152
      %p154 = scmp.ne.s32.totalorder %s142, %s143
      %p155 = scmp.eq.s32.totalorder %s28, 1
      %p156 = por %p154, %p155
      %p158 = scmp.ne.s32.totalorder %s143, %s157
      %p159 = scmp.eq.s32.totalorder %s28, 0
      %p160 = por %p158, %p159
      %s162 = sadd.s32 %s161, 1
      %p165 = scmp.eq.s32.totalorder %s22, 1
      %p166 = scmp.ne.s32.totalorder %s161, %s163
      %p167 = scmp.eq.s32.totalorder %s22, 0
      %p168 = por %p166, %p167
      %p169 = scmp.ne.s32.totalorder %s161, %s163
      %p170 = scmp.eq.s32.totalorder %s27, 1
      %p171 = por %p169, %p170
      %p172 = scmp.ne.s32.totalorder %s163, %s164
      %p173 = scmp.eq.s32.totalorder %s27, 0
      %p174 = por %p172, %p173
      %p175 = scmp.ne.s32.totalorder %s163, %s164
      %p176 = scmp.eq.s32.totalorder %s28, 1
      %p177 = por %p175, %p176
      %p179 = scmp.ne.s32.totalorder %s164, %s178
      %p180 = scmp.eq.s32.totalorder %s28, 0
      %p181 = por %p179, %p180
      %s183 = sadd.s32 %s182, 1
      %p186 = scmp.eq.s32.totalorder %s22, 1
      %p187 = scmp.ne.s32.totalorder %s182, %s184
      %p188 = scmp.eq.s32.totalorder %s22, 0
      %p189 = por %p187, %p188
      %p190 = scmp.ne.s32.totalorder %s182, %s184
      %p191 = scmp.eq.s32.totalorder %s27, 1
      %p192 = por %p190, %p191
      %p193 = scmp.ne.s32.totalorder %s184, %s185
      %p194 = scmp.eq.s32.totalorder %s27, 0
      %p195 = por %p193, %p194
      %p196 = scmp.ne.s32.totalorder %s184, %s185
      %p197 = scmp.eq.s32.totalorder %s28, 1
      %p198 = por %p196, %p197
      %p200 = scmp.ne.s32.totalorder %s185, %s199
      %p201 = scmp.eq.s32.totalorder %s28, 0
      %p202 = por %p200, %p201
      %s204 = sadd.s32 %s203, 1
      %p207 = scmp.eq.s32.totalorder %s22, 1
      %p208 = scmp.ne.s32.totalorder %s203, %s205
      %p209 = scmp.eq.s32.totalorder %s22, 0
      %p210 = por %p208, %p209
      %p211 = scmp.ne.s32.totalorder %s203, %s205
      %p212 = scmp.eq.s32.totalorder %s27, 1
      %p213 = por %p211, %p212
      %p214 = scmp.ne.s32.totalorder %s205, %s206
      %p215 = scmp.eq.s32.totalorder %s27, 0
      %p216 = por %p214, %p215
      %p217 = scmp.ne.s32.totalorder %s205, %s206
      %p218 = scmp.eq.s32.totalorder %s28, 1
      %p219 = por %p217, %p218
      %p221 = scmp.ne.s32.totalorder %s206, %s220
      %p222 = scmp.eq.s32.totalorder %s28, 0
      %p223 = por %p221, %p222
      %s224 = ssub.s32 %s22, %s29
      %p225 = scmp.eq.s32.totalorder %s224, 0
      %s227 = sadd.s32 %s226, 1
      %s228 = scalar_select %p225, %s226, %s227
      %p231 = pneg %p225
      %p232 = scmp.eq.s32.totalorder %s22, 1
      %p233 = por %p231, %p232
      %p234 = scmp.ne.s32.totalorder %s226, %s229
      %p235 = scmp.eq.s32.totalorder %s22, 0
      %p236 = por %p234, %p235
      %p237 = scmp.ne.s32.totalorder %s226, %s229
      %p238 = scmp.eq.s32.totalorder %s27, 1
      %p239 = por %p237, %p238
      %p240 = scmp.ne.s32.totalorder %s229, %s230
      %p241 = scmp.eq.s32.totalorder %s27, 0
      %p242 = por %p240, %p241
      %p243 = scmp.ne.s32.totalorder %s229, %s230
      %p244 = scmp.eq.s32.totalorder %s28, 1
      %p245 = por %p243, %p244
      %p247 = scmp.ne.s32.totalorder %s230, %s246
      %p248 = scmp.eq.s32.totalorder %s28, 0
      %p249 = por %p247, %p248
      %p250 = scmp.le.s32.totalorder 1, %s22
      %p251 = scmp.lt.s32.totalorder %s22, 3
      %p252 = pnand %p250, %p251
      %p253 = pneg %p252
      // Predicated region
      $region9: #{tpu_custom_call.1} parent=5 // pred_check
        _
      $region10: #{tpu_custom_call.1} parent=5 // pred_check_branch
        %255 = sbr.rel (%p252) target = $region12
      $region11: #{tpu_custom_call.1} parent=5 // pred_region
        %s256 = ssub.s32 %s22, 1
        // Predicated region
        $region13: #{tpu_custom_call.1} parent=11 // pred_check
          %p257 = pneg %p69
        $region14: #{tpu_custom_call.1} parent=11 // pred_check_branch
          %259 = sbr.rel (%p257) target = $region16
        $region15: #{tpu_custom_call.1} parent=11 // pred_region
          %s261 = ssub.s32 1280, 1280
          %262 = vsyncadd [#allocation6], %s261
          %s263 = sshll.u32 [#allocation5], 4
          %s264 = int_to_ptr.vmem [resolvable:$true] %s263
          %269 = dma.hbm_to_vmem [thread:$0]  %s1, 1280, %s264, [#allocation6], 256, 256, 16
        $region16: #{tpu_custom_call.1} parent=11 // pred_fallthru
          _
        // Predicated region
        $region17: #{tpu_custom_call.1} parent=11 // pred_check
          %p270 = pneg %p90
        $region18: #{tpu_custom_call.1} parent=11 // pred_check_branch
          %272 = sbr.rel (%p270) target = $region20
        $region19: #{tpu_custom_call.1} parent=11 // pred_region
          _
        $region20: #{tpu_custom_call.1} parent=11 // pred_fallthru
          _
        // Predicated region
        $region21: #{tpu_custom_call.1} parent=11 // pred_check
          %p273 = pneg %p111
        $region22: #{tpu_custom_call.1} parent=11 // pred_check_branch
          %275 = sbr.rel (%p273) target = $region24
        $region23: #{tpu_custom_call.1} parent=11 // pred_region
          _
        $region24: #{tpu_custom_call.1} parent=11 // pred_fallthru
          _
        // Predicated region
        $region25: #{tpu_custom_call.1} parent=11 // pred_check
          %p276 = pneg %p132
        $region26: #{tpu_custom_call.1} parent=11 // pred_check_branch
          %278 = sbr.rel (%p276) target = $region28
        $region27: #{tpu_custom_call.1} parent=11 // pred_region
          _
        $region28: #{tpu_custom_call.1} parent=11 // pred_fallthru
          _
        // Predicated region
        $region29: #{tpu_custom_call.1} parent=11 // pred_check
          %p279 = pneg %p153
        $region30: #{tpu_custom_call.1} parent=11 // pred_check_branch
          %281 = sbr.rel (%p279) target = $region32
        $region31: #{tpu_custom_call.1} parent=11 // pred_region
          %s283 = ssub.s32 3072, 3072
          %284 = vsyncadd [#allocation6], %s283
          %s285 = sshll.u32 [#allocation7], 4
          %s286 = int_to_ptr.vmem [resolvable:$true] %s285
          %291 = dma.hbm_to_vmem [thread:$0]  %s5, 3072, %s286, [#allocation6], 128, 128, 8
        $region32: #{tpu_custom_call.1} parent=11 // pred_fallthru
          _
        // Predicated region
        $region33: #{tpu_custom_call.1} parent=11 // pred_check
          %p292 = pneg %p174
        $region34: #{tpu_custom_call.1} parent=11 // pred_check_branch
          %294 = sbr.rel (%p292) target = $region36
        $region35: #{tpu_custom_call.1} parent=11 // pred_region
          _
        $region36: #{tpu_custom_call.1} parent=11 // pred_fallthru
          _
        // Predicated region
        $region37: #{tpu_custom_call.1} parent=11 // pred_check
          %p295 = pneg %p195
        $region38: #{tpu_custom_call.1} parent=11 // pred_check_branch
          %297 = sbr.rel (%p295) target = $region40
        $region39: #{tpu_custom_call.1} parent=11 // pred_region
          _
        $region40: #{tpu_custom_call.1} parent=11 // pred_fallthru
          _
        // Predicated region
        $region41: #{tpu_custom_call.1} parent=11 // pred_check
          %p298 = pneg %p216
        $region42: #{tpu_custom_call.1} parent=11 // pred_check_branch
          %300 = sbr.rel (%p298) target = $region44
        $region43: #{tpu_custom_call.1} parent=11 // pred_region
          _
        $region44: #{tpu_custom_call.1} parent=11 // pred_fallthru
          _
      $region12: #{tpu_custom_call.1} parent=5 // pred_fallthru
        _
      %p301 = scmp.lt.s32.totalorder %s22, 2
      // Predicated region
      $region45: #{tpu_custom_call.1} parent=5 // pred_check
        %p302 = pneg %p301
      $region46: #{tpu_custom_call.1} parent=5 // pred_check_branch
        %304 = sbr.rel (%p302) target = $region48
      $region47: #{tpu_custom_call.1} parent=5 // pred_region
        // Predicated region
        $region49: #{tpu_custom_call.1} parent=47 // pred_check
          %p305 = pneg %p42
        $region50: #{tpu_custom_call.1} parent=47 // pred_check_branch
          %307 = sbr.rel (%p305) target = $region52
        $region51: #{tpu_custom_call.1} parent=47 // pred_region
          %s308 = sand.u32 %s32, 1
          %s309 = scalar_lea.sflag [#allocation3], %s308
          %s310 = sand.u32 %s32, 1
          %s311 = smul.addr %s310, 16
          %s312 = scalar_lea.vmem [#allocation2], %s311
          %s313 = smul.u32 2, %s22
          %s315 = ssub.s32 256, 256
          %316 = vsyncadd %s309, %s315
          %s317 = smul.addr %s313, 128
          %s318 = scalar_lea.hbm %s0, %s317
          %s319 = sshll.u32 %s312, 4
          %s320 = int_to_ptr.vmem [resolvable:$true] %s319
          %325 = dma.hbm_to_vmem [thread:$0]  %s318, 256, %s320, %s309, 128, 128, 8
        $region52: #{tpu_custom_call.1} parent=47 // pred_fallthru
          _
      $region48: #{tpu_custom_call.1} parent=5 // pred_fallthru
        _
      %p326 = scmp.le.s32.totalorder 1, %s22
      %p327 = scmp.lt.s32.totalorder %s22, 3
      %p328 = pnand %p326, %p327
      %p329 = pneg %p328
      // Predicated region
      $region53: #{tpu_custom_call.1} parent=5 // pred_check
        _
      $region54: #{tpu_custom_call.1} parent=5 // pred_check_branch
        %331 = sbr.rel (%p328) target = $region56
      $region55: #{tpu_custom_call.1} parent=5 // pred_region
        %s332 = ssub.s32 %s22, 1
        %s333 = sand.u32 %s35, 1
        %s334 = scalar_lea.sflag [#allocation3], %s333
        %s335 = sand.u32 %s35, 1
        %s336 = smul.addr %s335, 16
        %s337 = scalar_lea.vmem [#allocation2], %s336
        // Predicated region
        $region57: #{tpu_custom_call.1} parent=55 // pred_check
          %p338 = pneg %p48
        $region58: #{tpu_custom_call.1} parent=55 // pred_check_branch
          %340 = sbr.rel (%p338) target = $region60
        $region59: #{tpu_custom_call.1} parent=55 // pred_region
          %341 = dma.done %s334, 256
        $region60: #{tpu_custom_call.1} parent=55 // pred_fallthru
          _
        // Predicated region
        $region61: #{tpu_custom_call.1} parent=55 // pred_check
          %p342 = pneg %p69
        $region62: #{tpu_custom_call.1} parent=55 // pred_check_branch
          %344 = sbr.rel (%p342) target = $region64
        $region63: #{tpu_custom_call.1} parent=55 // pred_region
          %345 = dma.done [#allocation6], 1280
        $region64: #{tpu_custom_call.1} parent=55 // pred_fallthru
          _
        // Predicated region
        $region65: #{tpu_custom_call.1} parent=55 // pred_check
          %p346 = pneg %p153
        $region66: #{tpu_custom_call.1} parent=55 // pred_check_branch
          %348 = sbr.rel (%p346) target = $region68
        $region67: #{tpu_custom_call.1} parent=55 // pred_region
          %349 = dma.done [#allocation6], 3072
        $region68: #{tpu_custom_call.1} parent=55 // pred_fallthru
          _
        %s350 = sand.u32 %s35, 1
        %s351 = scalar_lea.sflag [#allocation3], %s350
        %s352 = sand.u32 %s35, 1
        %s353 = smul.addr %s352, 16
        %s354 = scalar_lea.vmem [#allocation2], %s353
        %p355 = pneg %p48
        %p356 = pneg %p45
        %p357 = pneg %p69
        %p358 = pneg %p66
        %p359 = pneg %p90
        %p360 = pneg %p87
        %p361 = pneg %p111
        %p362 = pneg %p108
        %p363 = pneg %p132
        %p364 = pneg %p129
        %p365 = pneg %p153
        %p366 = pneg %p150
        %p367 = pneg %p174
        %p368 = pneg %p171
        %p369 = pneg %p195
        %p370 = pneg %p192
        %p371 = pneg %p216
        %p372 = pneg %p213
        %p373 = pneg %p242
        %p374 = pneg %p239
        %s375 = sand.u32 %s229, 1
        %s376 = scalar_lea.sflag [#allocation4], %s375
        %s377 = sand.u32 %s229, 1
        %s378 = smul.addr %s377, 16
        %s379 = scalar_lea.vmem [#allocation8], %s378
        %s380 = smul.u32 2, %s27
        %s381 = smul.u32 2, %s27
        %v382 = vld [vmem:[%s337] sm:$0xff]
        %v383 = vld [vmem:[%s337 + $0x8] sm:$0xff]
        %v384 = vld [vmem:[#allocation5] sm:$0xff]
        %v385 = vld [vmem:[#allocation5 + $0x8] sm:$0xff]
        %v386 = vld [vmem:[#allocation5 + $0x10] sm:$0xff]
        %v387 = vld [vmem:[#allocation5 + $0x18] sm:$0xff]
        %v388 = vld [vmem:[#allocation5 + $0x20] sm:$0xff]
        %v389 = vld [vmem:[#allocation5 + $0x28] sm:$0xff]
        %v390 = vld [vmem:[#allocation5 + $0x30] sm:$0xff]
        %v391 = vld [vmem:[#allocation5 + $0x38] sm:$0xff]
        %v392 = vld [vmem:[#allocation5 + $0x40] sm:$0xff]
        %v393 = vld [vmem:[#allocation5 + $0x48] sm:$0xff]
        %v394 = vld [vmem:[%s2] sm:$0x3]
        %v396 = vlaneseq
        %v397 = vshrl.u32 %v396, 7
        %v398 = vsub.s32 0, %v397
        %v399 = vrot.slane %v394, %v398
        %v400 = vlaneseq
        %v401 = vshrl.u32 %v400, 7
        %v402 = vsub.s32 1, %v401
        %v403 = vrot.slane %v394, %v402
        %vm406 = vcmask 326656
        %v408 = vsel %vm406, %v382, 0
        %v411 = vsel %vm406, %v383, 0
        %413 = vmatprep.subr.mxu0 %v385
        %414 = vmatpush1.msra.mxu0 %v384
        %415 = vmatprep.subr.mxu0 %v387
        %416 = vmatpush1.msra.mxu0 %v386
        %417 = vmatprep.subr.mxu0 %v389
        %418 = vmatpush1.msra.mxu0 %v388
        %419 = vmatprep.subr.mxu0 %v391
        %420 = vmatpush1.msra.mxu0 %v390
        %421 = vmatprep.subr.mxu0 %v393
        %422 = vmatpush1.msra.mxu0 %v392
        %423 = vmatprep.subr.mxu0 0.0
        %424 = vmatpush1.msra.mxu0 0.0
        %425 = vmatprep.subr.mxu0 0.0
        %426 = vmatpush1.msra.mxu0 0.0
        %427 = vmatprep.subr.mxu0 0.0
        %428 = vmatpush1.msra.mxu0 0.0
        %429 = vmatprep.subr.mxu0 0.0
        %430 = vmatpush1.msra.mxu0 0.0
        %431 = vmatprep.subr.mxu0 0.0
        %432 = vmatpush1.msra.mxu0 0.0
        %433 = vmatprep.subr.mxu0 0.0
        %434 = vmatpush1.msra.mxu0 0.0
        %435 = vmatprep.subr.mxu0 0.0
        %436 = vmatpush1.msra.mxu0 0.0
        %437 = vmatprep.subr.mxu0 0.0
        %438 = vmatpush1.msra.mxu0 0.0
        %439 = vmatprep.subr.mxu0 0.0
        %440 = vmatpush1.msra.mxu0 0.0
        %441 = vmatprep.subr.mxu0 0.0
        %442 = vmatpush1.msra.mxu0 0.0
        %443 = vmatprep.subr.mxu0 0.0
        %444 = vmatpush1.msra.mxu0 0.0
        %445 = vmatprep.subr.mxu0 0.0
        %446 = vmatpush1.msra.mxu0 0.0
        %447 = vmatprep.subr.mxu0 0.0
        %448 = vmatpush1.msra.mxu0 0.0
        %449 = vmatprep.subr.mxu0 0.0
        %450 = vmatpush1.msra.mxu0 0.0
        %451 = vmatprep.subr.mxu0 0.0
        %452 = vmatpush1.msra.mxu0 0.0
        %453 = vmatprep.subr.mxu0 0.0
        %454 = vmatpush1.msra.mxu0 0.0
        %455 = vmatprep.subr.mxu0 0.0
        %456 = vmatpush1.msra.mxu0 0.0
        %457 = vmatprep.subr.mxu0 0.0
        %458 = vmatpush1.msra.mxu0 0.0
        %459 = vmatprep.subr.mxu0 0.0
        %460 = vmatpush1.msra.mxu0 0.0
        %461 = vmatprep.subr.mxu0 0.0
        %462 = vmatpush1.msra.mxu0 0.0
        %463 = vmatprep.subr.mxu0 0.0
        %464 = vmatpush1.msra.mxu0 0.0
        %465 = vmatprep.subr.mxu0 0.0
        %466 = vmatpush1.msra.mxu0 0.0
        %467 = vmatprep.subr.mxu0 0.0
        %468 = vmatpush1.msra.mxu0 0.0
        %469 = vmatprep.subr.mxu0 0.0
        %470 = vmatpush1.msra.mxu0 0.0
        %471 = vmatprep.subr.mxu0 0.0
        %472 = vmatpush1.msra.mxu0 0.0
        %473 = vmatprep.subr.mxu0 0.0
        %474 = vmatpush1.msra.mxu0 0.0
        %475 = vmatprep.subr.mxu0 0.0
        %476 = vmatpush1.msra.mxu0 0.0
        %477 = vmatprep.mubr.f32.mxu0 0.0
        %478 = vmatmul.mubr.f32.gmra.mrb[0].mxu0 %v408
        %v479 = vpop.f32.mrb[0].mxu0
        %v480 = vadd.f32 %v399, %v479
        %v481 = vpop.f32.mrb[0].mxu0
        %v482 = vadd.f32 %v403, %v481
        %483 = vmatprep.mubr.f32.mxu0 0.0
        %484 = vmatmul.mubr.f32.gmra.mrb[0].mxu0 %v411
        %v485 = vpop.f32.mrb[0].mxu0
        %v486 = vadd.f32 %v399, %v485
        %v487 = vpop.f32.mrb[0].mxu0
        %v488 = vadd.f32 %v403, %v487
        %489 = vdwg.mxu0
        %v490 = vld [vmem:[%s3] sm:$0x3]
        %v491 = vld [vmem:[%s4] sm:$0x3]
        %vm492 = vcmask 523264
        %v493 = vsel %vm492, %v482, 0.0
        %v494 = vadd.f32 %v480, %v493
        %495 = vadd.xlane.f32.xlu0 %v494
        %v496 = vpop.xlane.xlu0 %495
        %v497 = vsel %vm492, %v488, 0.0
        %v498 = vadd.f32 %v486, %v497
        %499 = vadd.xlane.f32.xlu0 %v498
        %v500 = vpop.xlane.xlu0 %499
        %v501 = vrcp.pop 192.0
        %v502 = vmul.f32 %v496, %v501
        %v503 = vmul.f32 %v500, %v501
        %v504 = vsub.f32 %v480, %v502
        %v505 = vsub.f32 %v482, %v502
        %v506 = vsub.f32 %v486, %v503
        %v507 = vsub.f32 %v488, %v503
        %v508 = vmul.f32 %v504, %v504
        %v509 = vmul.f32 %v505, %v505
        %v510 = vmul.f32 %v506, %v506
        %v511 = vmul.f32 %v507, %v507
        %v512 = vsel %vm492, %v509, 0.0
        %v513 = vadd.f32 %v508, %v512
        %514 = vadd.xlane.f32.xlu0 %v513
        %v515 = vpop.xlane.xlu0 %514
        %v516 = vsel %vm492, %v511, 0.0
        %v517 = vadd.f32 %v510, %v516
        %518 = vadd.xlane.f32.xlu0 %v517
        %v519 = vpop.xlane.xlu0 %518
        %v520 = vmul.f32 %v515, %v501
        %v521 = vmul.f32 %v519, %v501
        %v522 = vadd.f32 %v520, 1e-05
        %v523 = vadd.f32 %v521, 1e-05
        %v524 = vrsqrt.pop %v522
        %v525 = vrsqrt.pop %v523
        %v526 = vmul.f32 %v504, %v524
        %v527 = vmul.f32 %v505, %v524
        %v528 = vmul.f32 %v506, %v525
        %v529 = vmul.f32 %v507, %v525
        %v531 = vlaneseq
        %v532 = vshrl.u32 %v531, 7
        %v533 = vsub.s32 0, %v532
        %v534 = vrot.slane %v490, %v533
        %v535 = vlaneseq
        %v536 = vshrl.u32 %v535, 7
        %v537 = vsub.s32 1, %v536
        %v538 = vrot.slane %v490, %v537
        %v541 = vmul.f32 %v526, %v534
        %v542 = vmul.f32 %v527, %v538
        %v543 = vmul.f32 %v528, %v534
        %v544 = vmul.f32 %v529, %v538
        %v546 = vlaneseq
        %v547 = vshrl.u32 %v546, 7
        %v548 = vsub.s32 0, %v547
        %v549 = vrot.slane %v491, %v548
        %v550 = vlaneseq
        %v551 = vshrl.u32 %v550, 7
        %v552 = vsub.s32 1, %v551
        %v553 = vrot.slane %v491, %v552
        %v556 = vadd.f32 %v541, %v549
        %v557 = vadd.f32 %v542, %v553
        %v558 = vadd.f32 %v543, %v549
        %v559 = vadd.f32 %v544, %v553
        %v560 = vmax.f32 %v556, 0.0
        %v561 = vmax.f32 %v557, 0.0
        %v562 = vmax.f32 %v558, 0.0
        %v563 = vmax.f32 %v559, 0.0
        %v564 = vld [vmem:[#allocation7] sm:$0xff]
        %v565 = vld [vmem:[#allocation7 + $0x8] sm:$0xff]
        %v566 = vld [vmem:[#allocation7 + $0x10] sm:$0xff]
        %v567 = vld [vmem:[#allocation7 + $0x18] sm:$0xff]
        %v568 = vld [vmem:[#allocation7 + $0x20] sm:$0xff]
        %v569 = vld [vmem:[#allocation7 + $0x28] sm:$0xff]
        %v570 = vld [vmem:[#allocation7 + $0x30] sm:$0xff]
        %v571 = vld [vmem:[#allocation7 + $0x38] sm:$0xff]
        %v572 = vld [vmem:[#allocation7 + $0x40] sm:$0xff]
        %v573 = vld [vmem:[#allocation7 + $0x48] sm:$0xff]
        %v574 = vld [vmem:[#allocation7 + $0x50] sm:$0xff]
        %v575 = vld [vmem:[#allocation7 + $0x58] sm:$0xff]
        %v576 = vld [vmem:[#allocation7 + $0x60] sm:$0xff]
        %v577 = vld [vmem:[#allocation7 + $0x68] sm:$0xff]
        %v578 = vld [vmem:[#allocation7 + $0x70] sm:$0xff]
        %v579 = vld [vmem:[#allocation7 + $0x78] sm:$0xff]
        %v580 = vld [vmem:[#allocation7 + $0x80] sm:$0xff]
        %v581 = vld [vmem:[#allocation7 + $0x88] sm:$0xff]
        %v582 = vld [vmem:[#allocation7 + $0x90] sm:$0xff]
        %v583 = vld [vmem:[#allocation7 + $0x98] sm:$0xff]
        %v584 = vld [vmem:[#allocation7 + $0xa0] sm:$0xff]
        %v585 = vld [vmem:[#allocation7 + $0xa8] sm:$0xff]
        %v586 = vld [vmem:[#allocation7 + $0xb0] sm:$0xff]
        %v587 = vld [vmem:[#allocation7 + $0xb8] sm:$0xff]
        %v588 = vld [vmem:[%s6] sm:$0x1]
        %v590 = vlaneseq
        %v591 = vshrl.u32 %v590, 7
        %v592 = vsub.s32 0, %v591
        %v593 = vrot.slane %v588, %v592
        %v596 = vsel %vm492, %v561, 0
        %v599 = vsel %vm492, %v563, 0
        %601 = vmatprep.subr.mxu0 0.0
        %602 = vmatpush1.msra.mxu0 %v564
        %603 = vmatprep.subr.mxu0 0.0
        %604 = vmatpush1.msra.mxu0 %v565
        %605 = vmatprep.subr.mxu0 0.0
        %606 = vmatpush1.msra.mxu0 %v566
        %607 = vmatprep.subr.mxu0 0.0
        %608 = vmatpush1.msra.mxu0 %v567
        %609 = vmatprep.subr.mxu0 0.0
        %610 = vmatpush1.msra.mxu0 %v568
        %611 = vmatprep.subr.mxu0 0.0
        %612 = vmatpush1.msra.mxu0 %v569
        %613 = vmatprep.subr.mxu0 0.0
        %614 = vmatpush1.msra.mxu0 %v570
        %615 = vmatprep.subr.mxu0 0.0
        %616 = vmatpush1.msra.mxu0 %v571
        %617 = vmatprep.subr.mxu0 0.0
        %618 = vmatpush1.msra.mxu0 %v572
        %619 = vmatprep.subr.mxu0 0.0
        %620 = vmatpush1.msra.mxu0 %v573
        %621 = vmatprep.subr.mxu0 0.0
        %622 = vmatpush1.msra.mxu0 %v574
        %623 = vmatprep.subr.mxu0 0.0
        %624 = vmatpush1.msra.mxu0 %v575
        %625 = vmatprep.subr.mxu0 0.0
        %626 = vmatpush1.msra.mxu0 %v576
        %627 = vmatprep.subr.mxu0 0.0
        %628 = vmatpush1.msra.mxu0 %v577
        %629 = vmatprep.subr.mxu0 0.0
        %630 = vmatpush1.msra.mxu0 %v578
        %631 = vmatprep.subr.mxu0 0.0
        %632 = vmatpush1.msra.mxu0 %v579
        %633 = vmatprep.subr.mxu0 0.0
        %634 = vmatpush1.msra.mxu0 %v580
        %635 = vmatprep.subr.mxu0 0.0
        %636 = vmatpush1.msra.mxu0 %v581
        %637 = vmatprep.subr.mxu0 0.0
        %638 = vmatpush1.msra.mxu0 %v582
        %639 = vmatprep.subr.mxu0 0.0
        %640 = vmatpush1.msra.mxu0 %v583
        %641 = vmatprep.subr.mxu0 0.0
        %642 = vmatpush1.msra.mxu0 %v584
        %643 = vmatprep.subr.mxu0 0.0
        %644 = vmatpush1.msra.mxu0 %v585
        %645 = vmatprep.subr.mxu0 0.0
        %646 = vmatpush1.msra.mxu0 %v586
        %647 = vmatprep.subr.mxu0 0.0
        %648 = vmatpush1.msra.mxu0 %v587
        %649 = vmatprep.subr.mxu0 0.0
        %650 = vmatpush1.msra.mxu0 0.0
        %651 = vmatprep.subr.mxu0 0.0
        %652 = vmatpush1.msra.mxu0 0.0
        %653 = vmatprep.subr.mxu0 0.0
        %654 = vmatpush1.msra.mxu0 0.0
        %655 = vmatprep.subr.mxu0 0.0
        %656 = vmatpush1.msra.mxu0 0.0
        %657 = vmatprep.subr.mxu0 0.0
        %658 = vmatpush1.msra.mxu0 0.0
        %659 = vmatprep.subr.mxu0 0.0
        %660 = vmatpush1.msra.mxu0 0.0
        %661 = vmatprep.subr.mxu0 0.0
        %662 = vmatpush1.msra.mxu0 0.0
        %663 = vmatprep.subr.mxu0 0.0
        %664 = vmatpush1.msra.mxu0 0.0
        %665 = vmatprep.mubr.f32.mxu0 %v596
        %666 = vmatmul.mubr.f32.gmra.mrb[0].mxu0 %v560
        %v667 = vpop.f32.mrb[0].mxu0
        %v668 = vadd.f32 %v593, %v667
        %v669 = vpop.f32.mrb[0].mxu0
        %670 = vmatprep.mubr.f32.mxu0 %v599
        %671 = vmatmul.mubr.f32.gmra.mrb[0].mxu0 %v562
        %v672 = vpop.f32.mrb[0].mxu0
        %v673 = vadd.f32 %v593, %v672
        %v674 = vpop.f32.mrb[0].mxu0
        %675 = vdwg.mxu0
        %v676 = vld [vmem:[%s7] sm:$0x1]
        %v677 = vld [vmem:[%s8] sm:$0x1]
        %vm678 = vcmask 785408
        %v679 = vsel %vm678, %v668, 0.0
        %680 = vadd.xlane.f32.xlu0 %v679
        %v681 = vpop.xlane.xlu0 %680
        %v682 = vsel %vm678, %v673, 0.0
        %683 = vadd.xlane.f32.xlu0 %v682
        %v684 = vpop.xlane.xlu0 %683
        %v685 = vrcp.pop 96.0
        %v686 = vmul.f32 %v681, %v685
        %v687 = vmul.f32 %v684, %v685
        %v688 = vsub.f32 %v668, %v686
        %v689 = vsub.f32 %v673, %v687
        %v690 = vmul.f32 %v688, %v688
        %v691 = vmul.f32 %v689, %v689
        %v692 = vsel %vm678, %v690, 0.0
        %693 = vadd.xlane.f32.xlu0 %v692
        %v694 = vpop.xlane.xlu0 %693
        %v695 = vsel %vm678, %v691, 0.0
        %696 = vadd.xlane.f32.xlu0 %v695
        %v697 = vpop.xlane.xlu0 %696
        %v698 = vmul.f32 %v694, %v685
        %v699 = vmul.f32 %v697, %v685
        %v700 = vadd.f32 %v698, 1e-05
        %v701 = vadd.f32 %v699, 1e-05
        %v702 = vrsqrt.pop %v700
        %v703 = vrsqrt.pop %v701
        %v704 = vmul.f32 %v688, %v702
        %v705 = vmul.f32 %v689, %v703
        %v707 = vlaneseq
        %v708 = vshrl.u32 %v707, 7
        %v709 = vsub.s32 0, %v708
        %v710 = vrot.slane %v676, %v709
        %v712 = vmul.f32 %v704, %v710
        %v713 = vmul.f32 %v705, %v710
        %v715 = vlaneseq
        %v716 = vshrl.u32 %v715, 7
        %v717 = vsub.s32 0, %v716
        %v718 = vrot.slane %v677, %v717
        %v720 = vadd.f32 %v712, %v718
        %v721 = vadd.f32 %v713, %v718
        %v722 = vmax.f32 %v720, 0.0
        %v723 = vmax.f32 %v721, 0.0
        %724 = vst.msk [vmem:[%s379] sm:$0xff] %vm678, %v722
        %725 = vst.msk [vmem:[%s379 + $0x8] sm:$0xff] %vm678, %v723
        %s726 = sand.u32 %s229, 1
        %s727 = scalar_lea.sflag [#allocation4], %s726
        %s728 = sand.u32 %s229, 1
        %s729 = smul.addr %s728, 16
        %s730 = scalar_lea.vmem [#allocation8], %s729
        // Predicated region
        $region69: #{tpu_custom_call.1} parent=55 // pred_check
          %p731 = pneg %p239
        $region70: #{tpu_custom_call.1} parent=55 // pred_check_branch
          %733 = sbr.rel (%p731) target = $region72
        $region71: #{tpu_custom_call.1} parent=55 // pred_region
          %s734 = smul.u32 2, %s27
          %s736 = ssub.s32 256, 256
          %737 = vsyncadd %s727, %s736
          %s738 = smul.addr %s734, 128
          %s739 = scalar_lea.hbm %s9, %s738
          %s740 = sshll.u32 %s730, 4
          %s741 = int_to_ptr.vmem [resolvable:$true] %s740
          %746 = dma.vmem_to_hbm [thread:$0]  %s741, 256, %s739, %s727, 128, 128, 8
        $region72: #{tpu_custom_call.1} parent=55 // pred_fallthru
          _
      $region56: #{tpu_custom_call.1} parent=5 // pred_fallthru
        _
      %p747 = scmp.le.s32.totalorder 2, %s22
      // Predicated region
      $region73: #{tpu_custom_call.1} parent=5 // pred_check
        %p748 = pneg %p747
      $region74: #{tpu_custom_call.1} parent=5 // pred_check_branch
        %750 = sbr.rel (%p748) target = $region76
      $region75: #{tpu_custom_call.1} parent=5 // pred_region
        %s751 = ssub.s32 %s22, 2
        // Predicated region
        $region77: #{tpu_custom_call.1} parent=75 // pred_check
          %p752 = pneg %p245
        $region78: #{tpu_custom_call.1} parent=75 // pred_check_branch
          %754 = sbr.rel (%p752) target = $region80
        $region79: #{tpu_custom_call.1} parent=75 // pred_region
          %s755 = sand.u32 %s230, 1
          %s756 = scalar_lea.sflag [#allocation4], %s755
          %s757 = sand.u32 %s230, 1
          %s758 = smul.addr %s757, 16
          %s759 = scalar_lea.vmem [#allocation8], %s758
          %760 = dma.done %s756, 256
        $region80: #{tpu_custom_call.1} parent=75 // pred_fallthru
          _
      $region76: #{tpu_custom_call.1} parent=5 // pred_fallthru
        _
    $region6: #{tpu_custom_call.1} parent=1 // loop_footer
      %s26 = sadd.s32 1, %s22
    $region7: #{tpu_custom_call.1} parent=1 // loop_footer_branch
      %21 = sbr.rel target = $region3
    $region8: #{tpu_custom_call.1} parent=1 // loop_exit
      _
    %761 = vsyncpa [#allocation3], 1
    %s762 = scalar_lea.sflag [#allocation3], 1
    %763 = vsyncpa %s762, 1
    %764 = vsyncpa [#allocation6], 1
    %765 = vsyncpa [#allocation4], 1
    %s766 = scalar_lea.sflag [#allocation4], 1
    %767 = vsyncpa %s766, 1

</llo_original>
